<compile_context>
chip_gen: v7x
topology: tpu7x:2x2x1
jax: 0.10.0
libtpu: 0.0.40
codegen_flags: <defaults>
</compile_context>

<pallas_src>
import functools
import math

import jax
import jax.numpy as jnp
from jax.experimental import pallas as pl
from jax.experimental.pallas import tpu as pltpu


HIDDEN = 128          # lane-aligned hidden width of the built-in discriminator
LEAKY_SLOPE = 0.2


# ---------------------------------------------------------------------------
# Built-in discriminator parameters (deterministic synthetic weights)
# ---------------------------------------------------------------------------
def init_netd_params(key, in_features, hidden=HIDDEN):
    k1, k2, k3 = jax.random.split(key, 3)
    w1 = jax.random.normal(k1, (in_features, hidden), jnp.float32) * math.sqrt(2.0 / in_features)
    b1 = jax.random.normal(k2, (hidden,), jnp.float32) * 0.01
    w2 = jax.random.normal(k3, (hidden, 1), jnp.float32) * math.sqrt(2.0 / hidden)
    b2 = jnp.zeros((1,), jnp.float32)          # does not affect the input-gradient
    return {"w1": w1, "b1": b1, "w2": w2, "b2": b2}


# ---------------------------------------------------------------------------
# Fused gradient-penalty kernel (one batch tile per grid step)
# ---------------------------------------------------------------------------
def _gp_kernel(alpha_ref, real_ref, fake_ref, w1_ref, w1t_ref, b1_ref, w2r_ref,
               out_ref):
    # --- interpolation: x = alpha * real + (1 - alpha) * fake ---------------
    alpha = alpha_ref[...]                                        # (TB, 1)
    x = alpha * real_ref[...] + (1.0 - alpha) * fake_ref[...]     # (TB, D)

    # --- netD forward (pre-activation; the scalar output y is not needed
    #     for the input-gradient) --------------------------------------------
    h = jnp.dot(x, w1_ref[...],
                preferred_element_type=jnp.float32) + b1_ref[...]  # (TB, H)

    # --- analytic backward of sum(netD(x)) w.r.t. x --------------------------
    # y = leaky_relu(h) @ W2 + b2  =>  d sum(y)/dh = W2^T * leaky'(h)
    dh = jnp.where(h > 0.0, 1.0, LEAKY_SLOPE) * w2r_ref[...]       # (TB, H)
    dx = jnp.dot(dh, w1t_ref[...],
                 preferred_element_type=jnp.float32)               # (TB, D)

    # --- per-sample gradient-norm penalty, partial sum over this tile --------
    g = dx + 1e-16
    sq = jnp.sum(g * g, axis=1, keepdims=True)                     # (TB, 1)
    res = (jnp.sqrt(sq) - 1.0) ** 2                                # (TB, 1)
    out_ref[0, 0] = jnp.sum(res)                                   # SMEM scalar


def _pick_batch_tile(batch, batch_block):
    """Largest multiple-of-8 divisor of `batch` capped at batch_block, else full batch."""
    c = min(batch_block, batch)
    c -= c % 8
    while c >= 8:
        if batch % c == 0:
            return c
        c -= 8
    return batch     # small / ragged batch -> single block (block == full dim, allowed)


def gradient_penalty_loss(key, real_data, fake_data, params, *, batch_block=128):
    B = real_data.shape[0]
    D = real_data.size // B
    rf = real_data.reshape(B, D).astype(jnp.float32)   # glue: flatten each sample
    ff = fake_data.reshape(B, D).astype(jnp.float32)

    # torch.rand(B, 1): one alpha per sample, broadcast over the sample.
    alpha = jax.random.uniform(key, (B, 1), jnp.float32)

    w1 = params["w1"].astype(jnp.float32)                   # (D, H)
    w1t = jnp.transpose(w1)                                  # glue: one-time W1^T
    b1 = params["b1"].reshape(1, -1).astype(jnp.float32)     # (1, H)
    w2r = params["w2"].reshape(1, -1).astype(jnp.float32)    # (1, H) == W2^T row
    hidden = w1.shape[1]

    tb = _pick_batch_tile(B, batch_block)
    nb = B // tb

    partial = pl.pallas_call(
        _gp_kernel,
        out_shape=jax.ShapeDtypeStruct((nb, 1), jnp.float32),
        grid=(nb,),
        in_specs=[
            pl.BlockSpec((tb, 1), lambda i: (i, 0)),          # alpha
            pl.BlockSpec((tb, D), lambda i: (i, 0)),          # real (flat)
            pl.BlockSpec((tb, D), lambda i: (i, 0)),          # fake (flat)
            pl.BlockSpec((D, hidden), lambda i: (0, 0)),      # W1   (resident)
            pl.BlockSpec((hidden, D), lambda i: (0, 0)),      # W1^T (resident)
            pl.BlockSpec((1, hidden), lambda i: (0, 0)),      # b1
            pl.BlockSpec((1, hidden), lambda i: (0, 0)),      # W2^T row
        ],
        out_specs=pl.BlockSpec((1, 1), lambda i: (i, 0),
                               memory_space=pltpu.MemorySpace.SMEM),
        compiler_params=pltpu.CompilerParams(
            dimension_semantics=("parallel",)),
    )(alpha, rf, ff, w1, w1t, b1, w2r)

    # Tiny epilogue: sum of nb partial sums, then mean over the batch.
    return jnp.sum(partial) / B


# ---------------------------------------------------------------------------
# Pure-JAX autodiff reference (same alpha, same built-in netD)
# ---------------------------------------------------------------------------
def _reference_gp(key, real, fake, params):
    B = real.shape[0]
    rf = real.reshape(B, -1).astype(jnp.float32)
    ff = fake.reshape(B, -1).astype(jnp.float32)
    alpha = jax.random.uniform(key, (B, 1), jnp.float32)
    x = alpha * rf + (1.0 - alpha) * ff
    w1, b1, w2, b2 = params["w1"], params["b1"], params["w2"], params["b2"]

    def disc_sum(xx):
        h = jnp.dot(xx, w1, precision=jax.lax.Precision.HIGHEST) + b1
        a = jnp.where(h > 0.0, h, LEAKY_SLOPE * h)
        y = jnp.dot(a, w2, precision=jax.lax.Precision.HIGHEST) + b2
        return jnp.sum(y)

    grads = jax.grad(disc_sum)(x)
    norms = jnp.sqrt(jnp.sum((grads + 1e-16) ** 2, axis=1))
    return jnp.mean((norms - 1.0) ** 2)


if __name__ == "__main__":
    key = jax.random.PRNGKey(0)
    k_alpha, k_real, k_fake, k_params = jax.random.split(key, 4)

    N, C, H, W = 2, 4, 16, 16
    real = jax.random.normal(k_real, (N, C, H, W), jnp.float32)
    fake = jax.random.normal(k_fake, (N, C, H, W), jnp.float32)
    params = init_netd_params(k_params, C * H * W)

    loss_fn = jax.jit(functools.partial(gradient_penalty_loss, params=params))
    gp = loss_fn(k_alpha, real, fake)
    jax.block_until_ready(gp)

    gp_ref = _reference_gp(k_alpha, real, fake, params)

    assert gp.shape == () and bool(jnp.isfinite(gp))
    assert abs(float(gp) - float(gp_ref)) <= 5e-2 * max(1e-3, abs(float(gp_ref))), (
        float(gp), float(gp_ref))
    print("KERNEL_OK")
</pallas_src>

<mosaic_0001>
module attributes {stable_mosaic.version = 11 : i64} {
  func.func @_gp_kernel(%arg0: i32, %arg1: memref<2x1xf32, #tpu.memory_space<vmem>>, %arg2: memref<2x1024xf32, #tpu.memory_space<vmem>>, %arg3: memref<2x1024xf32, #tpu.memory_space<vmem>>, %arg4: memref<1024x128xf32, #tpu.memory_space<vmem>>, %arg5: memref<128x1024xf32, #tpu.memory_space<vmem>>, %arg6: memref<1x128xf32, #tpu.memory_space<vmem>>, %arg7: memref<1x128xf32, #tpu.memory_space<vmem>>, %arg8: memref<1x1xf32, #tpu.memory_space<smem>>) attributes {dimension_semantics = [#tpu.dimension_semantics<parallel>], iteration_bounds = array<i64: 1>, scalar_prefetch = 0 : i64, scratch_operands = 0 : i64, tpu.core_type = #tpu.core_type<tc>, window_params = [{transform_indices = @transform_0, window_bounds = array<i64: 2, 1>}, {transform_indices = @transform_1, window_bounds = array<i64: 2, 1024>}, {transform_indices = @transform_2, window_bounds = array<i64: 2, 1024>}, {pipeline_mode = #tpu.pipeline_mode<synchronous>, transform_indices = @transform_3, window_bounds = array<i64: 1024, 128>}, {pipeline_mode = #tpu.pipeline_mode<synchronous>, transform_indices = @transform_4, window_bounds = array<i64: 128, 1024>}, {pipeline_mode = #tpu.pipeline_mode<synchronous>, transform_indices = @transform_5, window_bounds = array<i64: 1, 128>}, {pipeline_mode = #tpu.pipeline_mode<synchronous>, transform_indices = @transform_6, window_bounds = array<i64: 1, 128>}, {transform_indices = @transform_7, window_bounds = array<i64: 1, 1>}]} {
    %c0 = arith.constant 0 : index
    %c0_0 = arith.constant 0 : index
    %0 = vector.load %arg1[%c0, %c0_0] : memref<2x1xf32, #tpu.memory_space<vmem>>, vector<2x1xf32>
    %c0_1 = arith.constant 0 : index
    %c0_2 = arith.constant 0 : index
    %1 = vector.load %arg2[%c0_1, %c0_2] : memref<2x1024xf32, #tpu.memory_space<vmem>>, vector<2x1024xf32>
    %2 = vector.broadcast %0 : vector<2x1xf32> to vector<2x1024xf32>
    %3 = arith.mulf %2, %1 : vector<2x1024xf32>
    %cst = arith.constant 1.000000e+00 : f32
    %4 = vector.broadcast %cst : f32 to vector<2x1xf32>
    %5 = arith.subf %4, %0 : vector<2x1xf32>
    %c0_3 = arith.constant 0 : index
    %c0_4 = arith.constant 0 : index
    %6 = vector.load %arg3[%c0_3, %c0_4] : memref<2x1024xf32, #tpu.memory_space<vmem>>, vector<2x1024xf32>
    %7 = vector.broadcast %5 : vector<2x1xf32> to vector<2x1024xf32>
    %8 = arith.mulf %7, %6 : vector<2x1024xf32>
    %9 = arith.addf %3, %8 : vector<2x1024xf32>
    %c0_5 = arith.constant 0 : index
    %c0_6 = arith.constant 0 : index
    %10 = vector.load %arg4[%c0_5, %c0_6] : memref<1024x128xf32, #tpu.memory_space<vmem>>, vector<1024x128xf32>
    %cst_7 = arith.constant dense<0.000000e+00> : vector<2x128xf32>
    %11 = tpu.matmul %9, %10, %cst_7 {dimension_numbers = #tpu.dot_dimension_numbers<[1], [0], [0], [1], [0, 0, 1, 1], [], []>} : vector<2x1024xf32>, vector<1024x128xf32>, vector<2x128xf32> -> vector<2x128xf32>
    %c0_8 = arith.constant 0 : index
    %c0_9 = arith.constant 0 : index
    %12 = vector.load %arg6[%c0_8, %c0_9] : memref<1x128xf32, #tpu.memory_space<vmem>>, vector<1x128xf32>
    %13 = vector.broadcast %12 : vector<1x128xf32> to vector<2x128xf32>
    %14 = arith.addf %11, %13 : vector<2x128xf32>
    %cst_10 = arith.constant 0.000000e+00 : f32
    %15 = vector.broadcast %cst_10 : f32 to vector<2x128xf32>
    %16 = arith.cmpf ogt, %14, %15 : vector<2x128xf32>
    %cst_11 = arith.constant 1.000000e+00 : f32
    %cst_12 = arith.constant 2.000000e-01 : f32
    %17 = vector.broadcast %cst_11 : f32 to vector<2x128xf32>
    %18 = vector.broadcast %cst_12 : f32 to vector<2x128xf32>
    %19 = arith.select %16, %17, %18 : vector<2x128xi1>, vector<2x128xf32>
    %c0_13 = arith.constant 0 : index
    %c0_14 = arith.constant 0 : index
    %20 = vector.load %arg7[%c0_13, %c0_14] : memref<1x128xf32, #tpu.memory_space<vmem>>, vector<1x128xf32>
    %21 = vector.broadcast %20 : vector<1x128xf32> to vector<2x128xf32>
    %22 = arith.mulf %19, %21 : vector<2x128xf32>
    %c0_15 = arith.constant 0 : index
    %c0_16 = arith.constant 0 : index
    %23 = vector.load %arg5[%c0_15, %c0_16] : memref<128x1024xf32, #tpu.memory_space<vmem>>, vector<128x1024xf32>
    %cst_17 = arith.constant dense<0.000000e+00> : vector<2x1024xf32>
    %24 = tpu.matmul %22, %23, %cst_17 {dimension_numbers = #tpu.dot_dimension_numbers<[1], [0], [0], [1], [0, 0, 1, 1], [], []>} : vector<2x128xf32>, vector<128x1024xf32>, vector<2x1024xf32> -> vector<2x1024xf32>
    %cst_18 = arith.constant 1.000000e-16 : f32
    %25 = vector.broadcast %cst_18 : f32 to vector<2x1024xf32>
    %26 = arith.addf %24, %25 : vector<2x1024xf32>
    %27 = arith.mulf %26, %26 : vector<2x1024xf32>
    %cst_19 = arith.constant dense<0.000000e+00> : vector<2xf32>
    %28 = vector.multi_reduction <add>, %27, %cst_19 [1] : vector<2x1024xf32> to vector<2xf32>
    %29 = vector.shape_cast %28 : vector<2xf32> to vector<2x1xf32>
    %30 = math.sqrt %29 : vector<2x1xf32>
    %cst_20 = arith.constant 1.000000e+00 : f32
    %31 = vector.broadcast %cst_20 : f32 to vector<2x1xf32>
    %32 = arith.subf %30, %31 : vector<2x1xf32>
    %33 = arith.mulf %32, %32 : vector<2x1xf32>
    %34 = vector.shape_cast %33 : vector<2x1xf32> to vector<1x2x1xf32>
    %cst_21 = arith.constant dense<0.000000e+00> : vector<1xf32>
    %35 = vector.multi_reduction <add>, %34, %cst_21 [1, 2] : vector<1x2x1xf32> to vector<1xf32>
    %36 = vector.shape_cast %35 : vector<1xf32> to vector<1x1x1xf32>
    %37 = vector.extract %36[0, 0, 0] : f32 from vector<1x1x1xf32>
    %c0_22 = arith.constant 0 : index
    %c0_23 = arith.constant 0 : index
    %38 = memref.load %arg8[%c0_22, %c0_23] : memref<1x1xf32, #tpu.memory_space<smem>>
    memref.store %37, %arg8[%c0_22, %c0_23] : memref<1x1xf32, #tpu.memory_space<smem>>
    return
  }
  func.func @transform_0(%arg0: i32) -> (i32, i32) {
    %c0_i32 = arith.constant 0 : i32
    %c0_i32_0 = arith.constant 0 : i32
    return %arg0, %c0_i32 : i32, i32
  }
  func.func @transform_1(%arg0: i32) -> (i32, i32) {
    %c0_i32 = arith.constant 0 : i32
    %c0_i32_0 = arith.constant 0 : i32
    return %arg0, %c0_i32 : i32, i32
  }
  func.func @transform_2(%arg0: i32) -> (i32, i32) {
    %c0_i32 = arith.constant 0 : i32
    %c0_i32_0 = arith.constant 0 : i32
    return %arg0, %c0_i32 : i32, i32
  }
  func.func @transform_3(%arg0: i32) -> (i32, i32) {
    %c0_i32 = arith.constant 0 : i32
    %c0_i32_0 = arith.constant 0 : i32
    %c0_i32_1 = arith.constant 0 : i32
    return %c0_i32, %c0_i32_0 : i32, i32
  }
  func.func @transform_4(%arg0: i32) -> (i32, i32) {
    %c0_i32 = arith.constant 0 : i32
    %c0_i32_0 = arith.constant 0 : i32
    %c0_i32_1 = arith.constant 0 : i32
    return %c0_i32, %c0_i32_0 : i32, i32
  }
  func.func @transform_5(%arg0: i32) -> (i32, i32) {
    %c0_i32 = arith.constant 0 : i32
    %c0_i32_0 = arith.constant 0 : i32
    %c0_i32_1 = arith.constant 0 : i32
    return %c0_i32, %c0_i32_0 : i32, i32
  }
  func.func @transform_6(%arg0: i32) -> (i32, i32) {
    %c0_i32 = arith.constant 0 : i32
    %c0_i32_0 = arith.constant 0 : i32
    %c0_i32_1 = arith.constant 0 : i32
    return %c0_i32, %c0_i32_0 : i32, i32
  }
  func.func @transform_7(%arg0: i32) -> (i32, i32) {
    %c0_i32 = arith.constant 0 : i32
    %c0_i32_0 = arith.constant 0 : i32
    return %arg0, %c0_i32 : i32, i32
  }
}

</mosaic_0001>

<llo_original>
// kernel: gradient_penalty_loss.1
$region0: #{gradient_penalty_loss.1}
  #allocation0 [shape = 'u32[]', space=smem, size = 0x4, offset = 0x4, fixed_abs, tag = 'smem constant byte address 0x4 - core index']
  #allocation1 [shape = 'u32[144,128]{1,0:T(1,128)}', space=vmem, size = 0x12000, scoped, tag = 'internal scratch']
  %s0 = inlined_call_operand.vmem [shape: f32[2,1], index: 0, kind: input, shape index: {}]
  %s1 = inlined_call_operand.vmem [shape: f32[2,1024], index: 1, kind: input, shape index: {}]
  %s2 = inlined_call_operand.vmem [shape: f32[2,1024], index: 2, kind: input, shape index: {}]
  %s3 = inlined_call_operand.hbm [shape: f32[1024,128], index: 3, kind: input, shape index: {}]
  %s4 = inlined_call_operand.hbm [shape: f32[128,1024], index: 4, kind: input, shape index: {}]
  %s5 = inlined_call_operand.vmem [shape: f32[1,128], index: 5, kind: input, shape index: {}]
  %s6 = inlined_call_operand.vmem [shape: f32[1,128], index: 6, kind: input, shape index: {}]
  %s7 = inlined_call_operand.hbm [shape: f32[1,1], index: 7, kind: output, shape index: {}]
  %s8 = sld [smem:[#allocation0]]
  $region46: #{gradient_penalty_loss.1} parent=0
    _
  %s10 = ssub.s32 1, %s8
  %s11 = scalar_select 0, %s10, %s8
  $region1: #{gradient_penalty_loss.1} parent=0
    #allocation2 [shape = 'u8[524288]{0}', space=vmem, size = 0x80000, scoped, tag = 'input window, operand 3, single buffered']
    #allocation3 [shape = 's32[1]{0}', space=sflag, size = 0x4, scoped, tag = 'scoped memory for gradient_penalty_loss.1']
    #allocation4 [shape = 's32[1]{0}', space=sflag, size = 0x4, scoped, tag = 'scoped memory for gradient_penalty_loss.1']
    #allocation5 [shape = 'u8[524288]{0}', space=vmem, size = 0x80000, scoped, tag = 'input window, operand 4, single buffered']
    #allocation6 [shape = 's32[1]{0}', space=sflag, size = 0x4, scoped, tag = 'scoped memory for gradient_penalty_loss.1']
    #allocation7 [shape = 'u8[512]{0}', space=smem, size = 0x200, scoped, tag = 'output window, operand 0, single buffered']
    %12 = vsyncpa [#allocation3], 0
    %13 = vsyncpa [#allocation6], 0
    %14 = vsyncpa [#allocation4], 0
    // Predicated region
    $region2: #{gradient_penalty_loss.1} parent=1 // pred_check
      _
    $region3: #{gradient_penalty_loss.1} parent=1 // pred_check_branch
      %16 = sbr.rel (0) target = $region5
    $region4: #{gradient_penalty_loss.1} parent=1 // pred_region
      _
    $region5: #{gradient_penalty_loss.1} parent=1 // pred_fallthru
      _
    // Predicated region
    $region6: #{gradient_penalty_loss.1} parent=1 // pred_check
      _
    $region7: #{gradient_penalty_loss.1} parent=1 // pred_check_branch
      %18 = sbr.rel (0) target = $region9
    $region8: #{gradient_penalty_loss.1} parent=1 // pred_region
      _
    $region9: #{gradient_penalty_loss.1} parent=1 // pred_fallthru
      _
    // Predicated region
    $region10: #{gradient_penalty_loss.1} parent=1 // pred_check
      _
    $region11: #{gradient_penalty_loss.1} parent=1 // pred_check_branch
      %20 = sbr.rel (0) target = $region13
    $region12: #{gradient_penalty_loss.1} parent=1 // pred_region
      _
    $region13: #{gradient_penalty_loss.1} parent=1 // pred_fallthru
      _
    // Predicated region
    $region14: #{gradient_penalty_loss.1} parent=1 // pred_check
      _
    $region15: #{gradient_penalty_loss.1} parent=1 // pred_check_branch
      %22 = sbr.rel (0) target = $region17
    $region16: #{gradient_penalty_loss.1} parent=1 // pred_region
      %s24 = ssub.s32 16384, 16384
      %25 = vsyncadd [#allocation3], %s24
      %s26 = sshll.u32 [#allocation2], 4
      %s27 = int_to_ptr.vmem [resolvable:$true] %s26
      %32 = dma.hbm_to_vmem [thread:$0]  %s3, 16384, %s27, [#allocation3], 128, 128, 8
    $region17: #{gradient_penalty_loss.1} parent=1 // pred_fallthru
      _
    // Predicated region
    $region18: #{gradient_penalty_loss.1} parent=1 // pred_check
      _
    $region19: #{gradient_penalty_loss.1} parent=1 // pred_check_branch
      %34 = sbr.rel (0) target = $region21
    $region20: #{gradient_penalty_loss.1} parent=1 // pred_region
      %s36 = ssub.s32 16384, 16384
      %37 = vsyncadd [#allocation6], %s36
      %s38 = sshll.u32 [#allocation5], 4
      %s39 = int_to_ptr.vmem [resolvable:$true] %s38
      %44 = dma.hbm_to_vmem [thread:$0]  %s4, 16384, %s39, [#allocation6], 1024, 1024, 64
    $region21: #{gradient_penalty_loss.1} parent=1 // pred_fallthru
      _
    // Predicated region
    $region22: #{gradient_penalty_loss.1} parent=1 // pred_check
      _
    $region23: #{gradient_penalty_loss.1} parent=1 // pred_check_branch
      %46 = sbr.rel (0) target = $region25
    $region24: #{gradient_penalty_loss.1} parent=1 // pred_region
      _
    $region25: #{gradient_penalty_loss.1} parent=1 // pred_fallthru
      _
    // Predicated region
    $region26: #{gradient_penalty_loss.1} parent=1 // pred_check
      _
    $region27: #{gradient_penalty_loss.1} parent=1 // pred_check_branch
      %48 = sbr.rel (0) target = $region29
    $region28: #{gradient_penalty_loss.1} parent=1 // pred_region
      _
    $region29: #{gradient_penalty_loss.1} parent=1 // pred_fallthru
      _
    // Predicated region
    $region30: #{gradient_penalty_loss.1} parent=1 // pred_check
      _
    $region31: #{gradient_penalty_loss.1} parent=1 // pred_check_branch
      %50 = sbr.rel (0) target = $region33
    $region32: #{gradient_penalty_loss.1} parent=1 // pred_region
      %51 = dma.done [#allocation3], 16384
    $region33: #{gradient_penalty_loss.1} parent=1 // pred_fallthru
      _
    // Predicated region
    $region34: #{gradient_penalty_loss.1} parent=1 // pred_check
      _
    $region35: #{gradient_penalty_loss.1} parent=1 // pred_check_branch
      %53 = sbr.rel (0) target = $region37
    $region36: #{gradient_penalty_loss.1} parent=1 // pred_region
      %54 = dma.done [#allocation6], 16384
    $region37: #{gradient_penalty_loss.1} parent=1 // pred_fallthru
      _
    %v55 = vld [vmem:[%s0] sm:$0x3]
    %v56 = vld [vmem:[%s1] sm:$0xff]
    %v57 = vld [vmem:[%s1 + $0x8] sm:$0xff]
    %59 = vset.pattern.permute.xlu0 0
    %60 = vperm.xlu0 %59, %v55
    %v61 = vpop.permute.xlu0 %60
    %v65 = vcombine.high %v56, %v56
    %v67 = vunpack.c.l.s4 1983009808
    %v68 = vunpack.c.0.s8 %v67
    %v69 = vlaneseq
    %v70 = vshrl.u32 %v69, 7
    %v71 = vsub.s32 %v68, %v70
    %v72 = vrot.slane %v56, %v71
    %v74 = vunpack.c.l.s4 1983009808
    %v75 = vunpack.c.0.s8 %v74
    %v76 = vlaneseq
    %v77 = vshrl.u32 %v76, 7
    %v78 = vsub.s32 %v75, %v77
    %v79 = vrot.slane %v65, %v78
    %v80 = vcombine.high %v72, %v72
    %v81 = vcombine.high %v79, %v79
    %v82 = vcombine.high %v57, %v57
    %v84 = vunpack.c.l.s4 1983009808
    %v85 = vunpack.c.0.s8 %v84
    %v86 = vlaneseq
    %v87 = vshrl.u32 %v86, 7
    %v88 = vsub.s32 %v85, %v87
    %v89 = vrot.slane %v57, %v88
    %v91 = vunpack.c.l.s4 1983009808
    %v92 = vunpack.c.0.s8 %v91
    %v93 = vlaneseq
    %v94 = vshrl.u32 %v93, 7
    %v95 = vsub.s32 %v92, %v94
    %v96 = vrot.slane %v82, %v95
    %v97 = vcombine.high %v89, %v89
    %v98 = vcombine.high %v96, %v96
    %v107 = vmul.f32 %v61, %v72
    %v108 = vmul.f32 %v61, %v80
    %v109 = vmul.f32 %v61, %v79
    %v110 = vmul.f32 %v61, %v81
    %v111 = vmul.f32 %v61, %v89
    %v112 = vmul.f32 %v61, %v97
    %v113 = vmul.f32 %v61, %v96
    %v114 = vmul.f32 %v61, %v98
    %v115 = vsub.f32 1.0, %v55
    %v116 = vld [vmem:[%s2] sm:$0xff]
    %v117 = vld [vmem:[%s2 + $0x8] sm:$0xff]
    %119 = vset.pattern.permute.xlu0 0
    %120 = vperm.xlu0 %119, %v115
    %v121 = vpop.permute.xlu0 %120
    %v125 = vcombine.high %v116, %v116
    %v127 = vunpack.c.l.s4 1983009808
    %v128 = vunpack.c.0.s8 %v127
    %v129 = vlaneseq
    %v130 = vshrl.u32 %v129, 7
    %v131 = vsub.s32 %v128, %v130
    %v132 = vrot.slane %v116, %v131
    %v134 = vunpack.c.l.s4 1983009808
    %v135 = vunpack.c.0.s8 %v134
    %v136 = vlaneseq
    %v137 = vshrl.u32 %v136, 7
    %v138 = vsub.s32 %v135, %v137
    %v139 = vrot.slane %v125, %v138
    %v140 = vcombine.high %v132, %v132
    %v141 = vcombine.high %v139, %v139
    %v142 = vcombine.high %v117, %v117
    %v144 = vunpack.c.l.s4 1983009808
    %v145 = vunpack.c.0.s8 %v144
    %v146 = vlaneseq
    %v147 = vshrl.u32 %v146, 7
    %v148 = vsub.s32 %v145, %v147
    %v149 = vrot.slane %v117, %v148
    %v151 = vunpack.c.l.s4 1983009808
    %v152 = vunpack.c.0.s8 %v151
    %v153 = vlaneseq
    %v154 = vshrl.u32 %v153, 7
    %v155 = vsub.s32 %v152, %v154
    %v156 = vrot.slane %v142, %v155
    %v157 = vcombine.high %v149, %v149
    %v158 = vcombine.high %v156, %v156
    %v167 = vmul.f32 %v121, %v132
    %v168 = vmul.f32 %v121, %v140
    %v169 = vmul.f32 %v121, %v139
    %v170 = vmul.f32 %v121, %v141
    %v171 = vmul.f32 %v121, %v149
    %v172 = vmul.f32 %v121, %v157
    %v173 = vmul.f32 %v121, %v156
    %v174 = vmul.f32 %v121, %v158
    %v175 = vadd.f32 %v107, %v167
    %v176 = vadd.f32 %v108, %v168
    %v177 = vadd.f32 %v109, %v169
    %v178 = vadd.f32 %v110, %v170
    %v179 = vadd.f32 %v111, %v171
    %v180 = vadd.f32 %v112, %v172
    %v181 = vadd.f32 %v113, %v173
    %v182 = vadd.f32 %v114, %v174
    %v183 = vld [vmem:[#allocation2] sm:$0xff]
    %v184 = vld [vmem:[#allocation2 + $0x8] sm:$0xff]
    %v185 = vld [vmem:[#allocation2 + $0x10] sm:$0xff]
    %v186 = vld [vmem:[#allocation2 + $0x18] sm:$0xff]
    %v187 = vld [vmem:[#allocation2 + $0x20] sm:$0xff]
    %v188 = vld [vmem:[#allocation2 + $0x28] sm:$0xff]
    %v189 = vld [vmem:[#allocation2 + $0x30] sm:$0xff]
    %v190 = vld [vmem:[#allocation2 + $0x38] sm:$0xff]
    %v191 = vld [vmem:[#allocation2 + $0x40] sm:$0xff]
    %v192 = vld [vmem:[#allocation2 + $0x48] sm:$0xff]
    %v193 = vld [vmem:[#allocation2 + $0x50] sm:$0xff]
    %v194 = vld [vmem:[#allocation2 + $0x58] sm:$0xff]
    %v195 = vld [vmem:[#allocation2 + $0x60] sm:$0xff]
    %v196 = vld [vmem:[#allocation2 + $0x68] sm:$0xff]
    %v197 = vld [vmem:[#allocation2 + $0x70] sm:$0xff]
    %v198 = vld [vmem:[#allocation2 + $0x78] sm:$0xff]
    %v199 = vld [vmem:[#allocation2 + $0x80] sm:$0xff]
    %v200 = vld [vmem:[#allocation2 + $0x88] sm:$0xff]
    %v201 = vld [vmem:[#allocation2 + $0x90] sm:$0xff]
    %v202 = vld [vmem:[#allocation2 + $0x98] sm:$0xff]
    %v203 = vld [vmem:[#allocation2 + $0xa0] sm:$0xff]
    %v204 = vld [vmem:[#allocation2 + $0xa8] sm:$0xff]
    %v205 = vld [vmem:[#allocation2 + $0xb0] sm:$0xff]
    %v206 = vld [vmem:[#allocation2 + $0xb8] sm:$0xff]
    %v207 = vld [vmem:[#allocation2 + $0xc0] sm:$0xff]
    %v208 = vld [vmem:[#allocation2 + $0xc8] sm:$0xff]
    %v209 = vld [vmem:[#allocation2 + $0xd0] sm:$0xff]
    %v210 = vld [vmem:[#allocation2 + $0xd8] sm:$0xff]
    %v211 = vld [vmem:[#allocation2 + $0xe0] sm:$0xff]
    %v212 = vld [vmem:[#allocation2 + $0xe8] sm:$0xff]
    %v213 = vld [vmem:[#allocation2 + $0xf0] sm:$0xff]
    %v214 = vld [vmem:[#allocation2 + $0xf8] sm:$0xff]
    %v215 = vld [vmem:[#allocation2 + $0x100] sm:$0xff]
    %v216 = vld [vmem:[#allocation2 + $0x108] sm:$0xff]
    %v217 = vld [vmem:[#allocation2 + $0x110] sm:$0xff]
    %v218 = vld [vmem:[#allocation2 + $0x118] sm:$0xff]
    %v219 = vld [vmem:[#allocation2 + $0x120] sm:$0xff]
    %v220 = vld [vmem:[#allocation2 + $0x128] sm:$0xff]
    %v221 = vld [vmem:[#allocation2 + $0x130] sm:$0xff]
    %v222 = vld [vmem:[#allocation2 + $0x138] sm:$0xff]
    %v223 = vld [vmem:[#allocation2 + $0x140] sm:$0xff]
    %v224 = vld [vmem:[#allocation2 + $0x148] sm:$0xff]
    %v225 = vld [vmem:[#allocation2 + $0x150] sm:$0xff]
    %v226 = vld [vmem:[#allocation2 + $0x158] sm:$0xff]
    %v227 = vld [vmem:[#allocation2 + $0x160] sm:$0xff]
    %v228 = vld [vmem:[#allocation2 + $0x168] sm:$0xff]
    %v229 = vld [vmem:[#allocation2 + $0x170] sm:$0xff]
    %v230 = vld [vmem:[#allocation2 + $0x178] sm:$0xff]
    %v231 = vld [vmem:[#allocation2 + $0x180] sm:$0xff]
    %v232 = vld [vmem:[#allocation2 + $0x188] sm:$0xff]
    %v233 = vld [vmem:[#allocation2 + $0x190] sm:$0xff]
    %v234 = vld [vmem:[#allocation2 + $0x198] sm:$0xff]
    %v235 = vld [vmem:[#allocation2 + $0x1a0] sm:$0xff]
    %v236 = vld [vmem:[#allocation2 + $0x1a8] sm:$0xff]
    %v237 = vld [vmem:[#allocation2 + $0x1b0] sm:$0xff]
    %v238 = vld [vmem:[#allocation2 + $0x1b8] sm:$0xff]
    %v239 = vld [vmem:[#allocation2 + $0x1c0] sm:$0xff]
    %v240 = vld [vmem:[#allocation2 + $0x1c8] sm:$0xff]
    %v241 = vld [vmem:[#allocation2 + $0x1d0] sm:$0xff]
    %v242 = vld [vmem:[#allocation2 + $0x1d8] sm:$0xff]
    %v243 = vld [vmem:[#allocation2 + $0x1e0] sm:$0xff]
    %v244 = vld [vmem:[#allocation2 + $0x1e8] sm:$0xff]
    %v245 = vld [vmem:[#allocation2 + $0x1f0] sm:$0xff]
    %v246 = vld [vmem:[#allocation2 + $0x1f8] sm:$0xff]
    %v247 = vld [vmem:[#allocation2 + $0x200] sm:$0xff]
    %v248 = vld [vmem:[#allocation2 + $0x208] sm:$0xff]
    %v249 = vld [vmem:[#allocation2 + $0x210] sm:$0xff]
    %v250 = vld [vmem:[#allocation2 + $0x218] sm:$0xff]
    %v251 = vld [vmem:[#allocation2 + $0x220] sm:$0xff]
    %v252 = vld [vmem:[#allocation2 + $0x228] sm:$0xff]
    %v253 = vld [vmem:[#allocation2 + $0x230] sm:$0xff]
    %v254 = vld [vmem:[#allocation2 + $0x238] sm:$0xff]
    %v255 = vld [vmem:[#allocation2 + $0x240] sm:$0xff]
    %v256 = vld [vmem:[#allocation2 + $0x248] sm:$0xff]
    %v257 = vld [vmem:[#allocation2 + $0x250] sm:$0xff]
    %v258 = vld [vmem:[#allocation2 + $0x258] sm:$0xff]
    %v259 = vld [vmem:[#allocation2 + $0x260] sm:$0xff]
    %v260 = vld [vmem:[#allocation2 + $0x268] sm:$0xff]
    %v261 = vld [vmem:[#allocation2 + $0x270] sm:$0xff]
    %v262 = vld [vmem:[#allocation2 + $0x278] sm:$0xff]
    %v263 = vld [vmem:[#allocation2 + $0x280] sm:$0xff]
    %v264 = vld [vmem:[#allocation2 + $0x288] sm:$0xff]
    %v265 = vld [vmem:[#allocation2 + $0x290] sm:$0xff]
    %v266 = vld [vmem:[#allocation2 + $0x298] sm:$0xff]
    %v267 = vld [vmem:[#allocation2 + $0x2a0] sm:$0xff]
    %v268 = vld [vmem:[#allocation2 + $0x2a8] sm:$0xff]
    %v269 = vld [vmem:[#allocation2 + $0x2b0] sm:$0xff]
    %v270 = vld [vmem:[#allocation2 + $0x2b8] sm:$0xff]
    %v271 = vld [vmem:[#allocation2 + $0x2c0] sm:$0xff]
    %v272 = vld [vmem:[#allocation2 + $0x2c8] sm:$0xff]
    %v273 = vld [vmem:[#allocation2 + $0x2d0] sm:$0xff]
    %v274 = vld [vmem:[#allocation2 + $0x2d8] sm:$0xff]
    %v275 = vld [vmem:[#allocation2 + $0x2e0] sm:$0xff]
    %v276 = vld [vmem:[#allocation2 + $0x2e8] sm:$0xff]
    %v277 = vld [vmem:[#allocation2 + $0x2f0] sm:$0xff]
    %v278 = vld [vmem:[#allocation2 + $0x2f8] sm:$0xff]
    %v279 = vld [vmem:[#allocation2 + $0x300] sm:$0xff]
    %v280 = vld [vmem:[#allocation2 + $0x308] sm:$0xff]
    %v281 = vld [vmem:[#allocation2 + $0x310] sm:$0xff]
    %v282 = vld [vmem:[#allocation2 + $0x318] sm:$0xff]
    %v283 = vld [vmem:[#allocation2 + $0x320] sm:$0xff]
    %v284 = vld [vmem:[#allocation2 + $0x328] sm:$0xff]
    %v285 = vld [vmem:[#allocation2 + $0x330] sm:$0xff]
    %v286 = vld [vmem:[#allocation2 + $0x338] sm:$0xff]
    %v287 = vld [vmem:[#allocation2 + $0x340] sm:$0xff]
    %v288 = vld [vmem:[#allocation2 + $0x348] sm:$0xff]
    %v289 = vld [vmem:[#allocation2 + $0x350] sm:$0xff]
    %v290 = vld [vmem:[#allocation2 + $0x358] sm:$0xff]
    %v291 = vld [vmem:[#allocation2 + $0x360] sm:$0xff]
    %v292 = vld [vmem:[#allocation2 + $0x368] sm:$0xff]
    %v293 = vld [vmem:[#allocation2 + $0x370] sm:$0xff]
    %v294 = vld [vmem:[#allocation2 + $0x378] sm:$0xff]
    %v295 = vld [vmem:[#allocation2 + $0x380] sm:$0xff]
    %v296 = vld [vmem:[#allocation2 + $0x388] sm:$0xff]
    %v297 = vld [vmem:[#allocation2 + $0x390] sm:$0xff]
    %v298 = vld [vmem:[#allocation2 + $0x398] sm:$0xff]
    %v299 = vld [vmem:[#allocation2 + $0x3a0] sm:$0xff]
    %v300 = vld [vmem:[#allocation2 + $0x3a8] sm:$0xff]
    %v301 = vld [vmem:[#allocation2 + $0x3b0] sm:$0xff]
    %v302 = vld [vmem:[#allocation2 + $0x3b8] sm:$0xff]
    %v303 = vld [vmem:[#allocation2 + $0x3c0] sm:$0xff]
    %v304 = vld [vmem:[#allocation2 + $0x3c8] sm:$0xff]
    %v305 = vld [vmem:[#allocation2 + $0x3d0] sm:$0xff]
    %v306 = vld [vmem:[#allocation2 + $0x3d8] sm:$0xff]
    %v307 = vld [vmem:[#allocation2 + $0x3e0] sm:$0xff]
    %v308 = vld [vmem:[#allocation2 + $0x3e8] sm:$0xff]
    %v309 = vld [vmem:[#allocation2 + $0x3f0] sm:$0xff]
    %v310 = vld [vmem:[#allocation2 + $0x3f8] sm:$0xff]
    %v311 = vld [vmem:[%s5] sm:$0x1]
    %v313 = vlaneseq
    %v314 = vshrl.u32 %v313, 7
    %v315 = vsub.s32 0, %v314
    %v316 = vrot.slane %v311, %v315
    %318 = vmatprep.subr.mxu0 0.0
    %319 = vmatpush1.msra.mxu0 %v183
    %320 = vmatprep.subr.mxu0 0.0
    %321 = vmatpush1.msra.mxu0 %v184
    %322 = vmatprep.subr.mxu0 0.0
    %323 = vmatpush1.msra.mxu0 %v185
    %324 = vmatprep.subr.mxu0 0.0
    %325 = vmatpush1.msra.mxu0 %v186
    %326 = vmatprep.subr.mxu0 0.0
    %327 = vmatpush1.msra.mxu0 %v187
    %328 = vmatprep.subr.mxu0 0.0
    %329 = vmatpush1.msra.mxu0 %v188
    %330 = vmatprep.subr.mxu0 0.0
    %331 = vmatpush1.msra.mxu0 %v189
    %332 = vmatprep.subr.mxu0 0.0
    %333 = vmatpush1.msra.mxu0 %v190
    %334 = vmatprep.subr.mxu0 0.0
    %335 = vmatpush1.msra.mxu0 %v191
    %336 = vmatprep.subr.mxu0 0.0
    %337 = vmatpush1.msra.mxu0 %v192
    %338 = vmatprep.subr.mxu0 0.0
    %339 = vmatpush1.msra.mxu0 %v193
    %340 = vmatprep.subr.mxu0 0.0
    %341 = vmatpush1.msra.mxu0 %v194
    %342 = vmatprep.subr.mxu0 0.0
    %343 = vmatpush1.msra.mxu0 %v195
    %344 = vmatprep.subr.mxu0 0.0
    %345 = vmatpush1.msra.mxu0 %v196
    %346 = vmatprep.subr.mxu0 0.0
    %347 = vmatpush1.msra.mxu0 %v197
    %348 = vmatprep.subr.mxu0 0.0
    %349 = vmatpush1.msra.mxu0 %v198
    %350 = vmatprep.subr.mxu0 0.0
    %351 = vmatpush1.msra.mxu0 %v199
    %352 = vmatprep.subr.mxu0 0.0
    %353 = vmatpush1.msra.mxu0 %v200
    %354 = vmatprep.subr.mxu0 0.0
    %355 = vmatpush1.msra.mxu0 %v201
    %356 = vmatprep.subr.mxu0 0.0
    %357 = vmatpush1.msra.mxu0 %v202
    %358 = vmatprep.subr.mxu0 0.0
    %359 = vmatpush1.msra.mxu0 %v203
    %360 = vmatprep.subr.mxu0 0.0
    %361 = vmatpush1.msra.mxu0 %v204
    %362 = vmatprep.subr.mxu0 0.0
    %363 = vmatpush1.msra.mxu0 %v205
    %364 = vmatprep.subr.mxu0 0.0
    %365 = vmatpush1.msra.mxu0 %v206
    %366 = vmatprep.subr.mxu0 0.0
    %367 = vmatpush1.msra.mxu0 %v207
    %368 = vmatprep.subr.mxu0 0.0
    %369 = vmatpush1.msra.mxu0 %v208
    %370 = vmatprep.subr.mxu0 0.0
    %371 = vmatpush1.msra.mxu0 %v209
    %372 = vmatprep.subr.mxu0 0.0
    %373 = vmatpush1.msra.mxu0 %v210
    %374 = vmatprep.subr.mxu0 0.0
    %375 = vmatpush1.msra.mxu0 %v211
    %376 = vmatprep.subr.mxu0 0.0
    %377 = vmatpush1.msra.mxu0 %v212
    %378 = vmatprep.subr.mxu0 0.0
    %379 = vmatpush1.msra.mxu0 %v213
    %380 = vmatprep.subr.mxu0 0.0
    %381 = vmatpush1.msra.mxu0 %v214
    %382 = vmatprep.mubr.f32.mxu0 %v176
    %383 = vmatmul.mubr.f32.gmra.mrb[0].mxu0 %v175
    %v384 = vpop.f32.mrb[0].mxu0
    %v385 = vadd.f32 %v316, %v384
    %v386 = vpop.f32.mrb[0].mxu0
    %387 = vdwg.mxu0
    %388 = vmatprep.subr.mxu0 0.0
    %389 = vmatpush1.msra.mxu0 %v215
    %390 = vmatprep.subr.mxu0 0.0
    %391 = vmatpush1.msra.mxu0 %v216
    %392 = vmatprep.subr.mxu0 0.0
    %393 = vmatpush1.msra.mxu0 %v217
    %394 = vmatprep.subr.mxu0 0.0
    %395 = vmatpush1.msra.mxu0 %v218
    %396 = vmatprep.subr.mxu0 0.0
    %397 = vmatpush1.msra.mxu0 %v219
    %398 = vmatprep.subr.mxu0 0.0
    %399 = vmatpush1.msra.mxu0 %v220
    %400 = vmatprep.subr.mxu0 0.0
    %401 = vmatpush1.msra.mxu0 %v221
    %402 = vmatprep.subr.mxu0 0.0
    %403 = vmatpush1.msra.mxu0 %v222
    %404 = vmatprep.subr.mxu0 0.0
    %405 = vmatpush1.msra.mxu0 %v223
    %406 = vmatprep.subr.mxu0 0.0
    %407 = vmatpush1.msra.mxu0 %v224
    %408 = vmatprep.subr.mxu0 0.0
    %409 = vmatpush1.msra.mxu0 %v225
    %410 = vmatprep.subr.mxu0 0.0
    %411 = vmatpush1.msra.mxu0 %v226
    %412 = vmatprep.subr.mxu0 0.0
    %413 = vmatpush1.msra.mxu0 %v227
    %414 = vmatprep.subr.mxu0 0.0
    %415 = vmatpush1.msra.mxu0 %v228
    %416 = vmatprep.subr.mxu0 0.0
    %417 = vmatpush1.msra.mxu0 %v229
    %418 = vmatprep.subr.mxu0 0.0
    %419 = vmatpush1.msra.mxu0 %v230
    %420 = vmatprep.subr.mxu0 0.0
    %421 = vmatpush1.msra.mxu0 %v231
    %422 = vmatprep.subr.mxu0 0.0
    %423 = vmatpush1.msra.mxu0 %v232
    %424 = vmatprep.subr.mxu0 0.0
    %425 = vmatpush1.msra.mxu0 %v233
    %426 = vmatprep.subr.mxu0 0.0
    %427 = vmatpush1.msra.mxu0 %v234
    %428 = vmatprep.subr.mxu0 0.0
    %429 = vmatpush1.msra.mxu0 %v235
    %430 = vmatprep.subr.mxu0 0.0
    %431 = vmatpush1.msra.mxu0 %v236
    %432 = vmatprep.subr.mxu0 0.0
    %433 = vmatpush1.msra.mxu0 %v237
    %434 = vmatprep.subr.mxu0 0.0
    %435 = vmatpush1.msra.mxu0 %v238
    %436 = vmatprep.subr.mxu0 0.0
    %437 = vmatpush1.msra.mxu0 %v239
    %438 = vmatprep.subr.mxu0 0.0
    %439 = vmatpush1.msra.mxu0 %v240
    %440 = vmatprep.subr.mxu0 0.0
    %441 = vmatpush1.msra.mxu0 %v241
    %442 = vmatprep.subr.mxu0 0.0
    %443 = vmatpush1.msra.mxu0 %v242
    %444 = vmatprep.subr.mxu0 0.0
    %445 = vmatpush1.msra.mxu0 %v243
    %446 = vmatprep.subr.mxu0 0.0
    %447 = vmatpush1.msra.mxu0 %v244
    %448 = vmatprep.subr.mxu0 0.0
    %449 = vmatpush1.msra.mxu0 %v245
    %450 = vmatprep.subr.mxu0 0.0
    %451 = vmatpush1.msra.mxu0 %v246
    %452 = vmatprep.mubr.f32.mxu0 %v178
    %453 = vmatmul.mubr.f32.gmra.mrb[0].mxu0 %v177
    %v454 = vpop.f32.mrb[0].mxu0
    %v455 = vadd.f32 %v385, %v454
    %v456 = vpop.f32.mrb[0].mxu0
    %457 = vdwg.mxu0
    %458 = vmatprep.subr.mxu0 0.0
    %459 = vmatpush1.msra.mxu0 %v247
    %460 = vmatprep.subr.mxu0 0.0
    %461 = vmatpush1.msra.mxu0 %v248
    %462 = vmatprep.subr.mxu0 0.0
    %463 = vmatpush1.msra.mxu0 %v249
    %464 = vmatprep.subr.mxu0 0.0
    %465 = vmatpush1.msra.mxu0 %v250
    %466 = vmatprep.subr.mxu0 0.0
    %467 = vmatpush1.msra.mxu0 %v251
    %468 = vmatprep.subr.mxu0 0.0
    %469 = vmatpush1.msra.mxu0 %v252
    %470 = vmatprep.subr.mxu0 0.0
    %471 = vmatpush1.msra.mxu0 %v253
    %472 = vmatprep.subr.mxu0 0.0
    %473 = vmatpush1.msra.mxu0 %v254
    %474 = vmatprep.subr.mxu0 0.0
    %475 = vmatpush1.msra.mxu0 %v255
    %476 = vmatprep.subr.mxu0 0.0
    %477 = vmatpush1.msra.mxu0 %v256
    %478 = vmatprep.subr.mxu0 0.0
    %479 = vmatpush1.msra.mxu0 %v257
    %480 = vmatprep.subr.mxu0 0.0
    %481 = vmatpush1.msra.mxu0 %v258
    %482 = vmatprep.subr.mxu0 0.0
    %483 = vmatpush1.msra.mxu0 %v259
    %484 = vmatprep.subr.mxu0 0.0
    %485 = vmatpush1.msra.mxu0 %v260
    %486 = vmatprep.subr.mxu0 0.0
    %487 = vmatpush1.msra.mxu0 %v261
    %488 = vmatprep.subr.mxu0 0.0
    %489 = vmatpush1.msra.mxu0 %v262
    %490 = vmatprep.subr.mxu0 0.0
    %491 = vmatpush1.msra.mxu0 %v263
    %492 = vmatprep.subr.mxu0 0.0
    %493 = vmatpush1.msra.mxu0 %v264
    %494 = vmatprep.subr.mxu0 0.0
    %495 = vmatpush1.msra.mxu0 %v265
    %496 = vmatprep.subr.mxu0 0.0
    %497 = vmatpush1.msra.mxu0 %v266
    %498 = vmatprep.subr.mxu0 0.0
    %499 = vmatpush1.msra.mxu0 %v267
    %500 = vmatprep.subr.mxu0 0.0
    %501 = vmatpush1.msra.mxu0 %v268
    %502 = vmatprep.subr.mxu0 0.0
    %503 = vmatpush1.msra.mxu0 %v269
    %504 = vmatprep.subr.mxu0 0.0
    %505 = vmatpush1.msra.mxu0 %v270
    %506 = vmatprep.subr.mxu0 0.0
    %507 = vmatpush1.msra.mxu0 %v271
    %508 = vmatprep.subr.mxu0 0.0
    %509 = vmatpush1.msra.mxu0 %v272
    %510 = vmatprep.subr.mxu0 0.0
    %511 = vmatpush1.msra.mxu0 %v273
    %512 = vmatprep.subr.mxu0 0.0
    %513 = vmatpush1.msra.mxu0 %v274
    %514 = vmatprep.subr.mxu0 0.0
    %515 = vmatpush1.msra.mxu0 %v275
    %516 = vmatprep.subr.mxu0 0.0
    %517 = vmatpush1.msra.mxu0 %v276
    %518 = vmatprep.subr.mxu0 0.0
    %519 = vmatpush1.msra.mxu0 %v277
    %520 = vmatprep.subr.mxu0 0.0
    %521 = vmatpush1.msra.mxu0 %v278
    %522 = vmatprep.mubr.f32.mxu0 %v180
    %523 = vmatmul.mubr.f32.gmra.mrb[0].mxu0 %v179
    %v524 = vpop.f32.mrb[0].mxu0
    %v525 = vadd.f32 %v455, %v524
    %v526 = vpop.f32.mrb[0].mxu0
    %527 = vdwg.mxu0
    %528 = vmatprep.subr.mxu0 0.0
    %529 = vmatpush1.msra.mxu0 %v279
    %530 = vmatprep.subr.mxu0 0.0
    %531 = vmatpush1.msra.mxu0 %v280
    %532 = vmatprep.subr.mxu0 0.0
    %533 = vmatpush1.msra.mxu0 %v281
    %534 = vmatprep.subr.mxu0 0.0
    %535 = vmatpush1.msra.mxu0 %v282
    %536 = vmatprep.subr.mxu0 0.0
    %537 = vmatpush1.msra.mxu0 %v283
    %538 = vmatprep.subr.mxu0 0.0
    %539 = vmatpush1.msra.mxu0 %v284
    %540 = vmatprep.subr.mxu0 0.0
    %541 = vmatpush1.msra.mxu0 %v285
    %542 = vmatprep.subr.mxu0 0.0
    %543 = vmatpush1.msra.mxu0 %v286
    %544 = vmatprep.subr.mxu0 0.0
    %545 = vmatpush1.msra.mxu0 %v287
    %546 = vmatprep.subr.mxu0 0.0
    %547 = vmatpush1.msra.mxu0 %v288
    %548 = vmatprep.subr.mxu0 0.0
    %549 = vmatpush1.msra.mxu0 %v289
    %550 = vmatprep.subr.mxu0 0.0
    %551 = vmatpush1.msra.mxu0 %v290
    %552 = vmatprep.subr.mxu0 0.0
    %553 = vmatpush1.msra.mxu0 %v291
    %554 = vmatprep.subr.mxu0 0.0
    %555 = vmatpush1.msra.mxu0 %v292
    %556 = vmatprep.subr.mxu0 0.0
    %557 = vmatpush1.msra.mxu0 %v293
    %558 = vmatprep.subr.mxu0 0.0
    %559 = vmatpush1.msra.mxu0 %v294
    %560 = vmatprep.subr.mxu0 0.0
    %561 = vmatpush1.msra.mxu0 %v295
    %562 = vmatprep.subr.mxu0 0.0
    %563 = vmatpush1.msra.mxu0 %v296
    %564 = vmatprep.subr.mxu0 0.0
    %565 = vmatpush1.msra.mxu0 %v297
    %566 = vmatprep.subr.mxu0 0.0
    %567 = vmatpush1.msra.mxu0 %v298
    %568 = vmatprep.subr.mxu0 0.0
    %569 = vmatpush1.msra.mxu0 %v299
    %570 = vmatprep.subr.mxu0 0.0
    %571 = vmatpush1.msra.mxu0 %v300
    %572 = vmatprep.subr.mxu0 0.0
    %573 = vmatpush1.msra.mxu0 %v301
    %574 = vmatprep.subr.mxu0 0.0
    %575 = vmatpush1.msra.mxu0 %v302
    %576 = vmatprep.subr.mxu0 0.0
    %577 = vmatpush1.msra.mxu0 %v303
    %578 = vmatprep.subr.mxu0 0.0
    %579 = vmatpush1.msra.mxu0 %v304
    %580 = vmatprep.subr.mxu0 0.0
    %581 = vmatpush1.msra.mxu0 %v305
    %582 = vmatprep.subr.mxu0 0.0
    %583 = vmatpush1.msra.mxu0 %v306
    %584 = vmatprep.subr.mxu0 0.0
    %585 = vmatpush1.msra.mxu0 %v307
    %586 = vmatprep.subr.mxu0 0.0
    %587 = vmatpush1.msra.mxu0 %v308
    %588 = vmatprep.subr.mxu0 0.0
    %589 = vmatpush1.msra.mxu0 %v309
    %590 = vmatprep.subr.mxu0 0.0
    %591 = vmatpush1.msra.mxu0 %v310
    %592 = vmatprep.mubr.f32.mxu0 %v182
    %593 = vmatmul.mubr.f32.gmra.mrb[0].mxu0 %v181
    %v594 = vpop.f32.mrb[0].mxu0
    %v595 = vadd.f32 %v525, %v594
    %v596 = vpop.f32.mrb[0].mxu0
    %597 = vdwg.mxu0
    %vm598 = vcmp.gt.f32.partialorder %v595, 0.0
    %v599 = vsel %vm598, 1.0, 0.2
    %v600 = vld [vmem:[%s6] sm:$0x1]
    %v602 = vlaneseq
    %v603 = vshrl.u32 %v602, 7
    %v604 = vsub.s32 0, %v603
    %v605 = vrot.slane %v600, %v604
    %v607 = vmul.f32 %v599, %v605
    %v608 = vld [vmem:[#allocation5] sm:$0xff]
    %v609 = vld [vmem:[#allocation5 + $0x8] sm:$0xff]
    %v610 = vld [vmem:[#allocation5 + $0x10] sm:$0xff]
    %v611 = vld [vmem:[#allocation5 + $0x18] sm:$0xff]
    %v612 = vld [vmem:[#allocation5 + $0x20] sm:$0xff]
    %v613 = vld [vmem:[#allocation5 + $0x28] sm:$0xff]
    %v614 = vld [vmem:[#allocation5 + $0x30] sm:$0xff]
    %v615 = vld [vmem:[#allocation5 + $0x38] sm:$0xff]
    %v616 = vld [vmem:[#allocation5 + $0x40] sm:$0xff]
    %v617 = vld [vmem:[#allocation5 + $0x48] sm:$0xff]
    %v618 = vld [vmem:[#allocation5 + $0x50] sm:$0xff]
    %v619 = vld [vmem:[#allocation5 + $0x58] sm:$0xff]
    %v620 = vld [vmem:[#allocation5 + $0x60] sm:$0xff]
    %v621 = vld [vmem:[#allocation5 + $0x68] sm:$0xff]
    %v622 = vld [vmem:[#allocation5 + $0x70] sm:$0xff]
    %v623 = vld [vmem:[#allocation5 + $0x78] sm:$0xff]
    %v624 = vld [vmem:[#allocation5 + $0x80] sm:$0xff]
    %v625 = vld [vmem:[#allocation5 + $0x88] sm:$0xff]
    %v626 = vld [vmem:[#allocation5 + $0x90] sm:$0xff]
    %v627 = vld [vmem:[#allocation5 + $0x98] sm:$0xff]
    %v628 = vld [vmem:[#allocation5 + $0xa0] sm:$0xff]
    %v629 = vld [vmem:[#allocation5 + $0xa8] sm:$0xff]
    %v630 = vld [vmem:[#allocation5 + $0xb0] sm:$0xff]
    %v631 = vld [vmem:[#allocation5 + $0xb8] sm:$0xff]
    %v632 = vld [vmem:[#allocation5 + $0xc0] sm:$0xff]
    %v633 = vld [vmem:[#allocation5 + $0xc8] sm:$0xff]
    %v634 = vld [vmem:[#allocation5 + $0xd0] sm:$0xff]
    %v635 = vld [vmem:[#allocation5 + $0xd8] sm:$0xff]
    %v636 = vld [vmem:[#allocation5 + $0xe0] sm:$0xff]
    %v637 = vld [vmem:[#allocation5 + $0xe8] sm:$0xff]
    %v638 = vld [vmem:[#allocation5 + $0xf0] sm:$0xff]
    %v639 = vld [vmem:[#allocation5 + $0xf8] sm:$0xff]
    %v640 = vld [vmem:[#allocation5 + $0x100] sm:$0xff]
    %v641 = vld [vmem:[#allocation5 + $0x108] sm:$0xff]
    %v642 = vld [vmem:[#allocation5 + $0x110] sm:$0xff]
    %v643 = vld [vmem:[#allocation5 + $0x118] sm:$0xff]
    %v644 = vld [vmem:[#allocation5 + $0x120] sm:$0xff]
    %v645 = vld [vmem:[#allocation5 + $0x128] sm:$0xff]
    %v646 = vld [vmem:[#allocation5 + $0x130] sm:$0xff]
    %v647 = vld [vmem:[#allocation5 + $0x138] sm:$0xff]
    %v648 = vld [vmem:[#allocation5 + $0x140] sm:$0xff]
    %v649 = vld [vmem:[#allocation5 + $0x148] sm:$0xff]
    %v650 = vld [vmem:[#allocation5 + $0x150] sm:$0xff]
    %v651 = vld [vmem:[#allocation5 + $0x158] sm:$0xff]
    %v652 = vld [vmem:[#allocation5 + $0x160] sm:$0xff]
    %v653 = vld [vmem:[#allocation5 + $0x168] sm:$0xff]
    %v654 = vld [vmem:[#allocation5 + $0x170] sm:$0xff]
    %v655 = vld [vmem:[#allocation5 + $0x178] sm:$0xff]
    %v656 = vld [vmem:[#allocation5 + $0x180] sm:$0xff]
    %v657 = vld [vmem:[#allocation5 + $0x188] sm:$0xff]
    %v658 = vld [vmem:[#allocation5 + $0x190] sm:$0xff]
    %v659 = vld [vmem:[#allocation5 + $0x198] sm:$0xff]
    %v660 = vld [vmem:[#allocation5 + $0x1a0] sm:$0xff]
    %v661 = vld [vmem:[#allocation5 + $0x1a8] sm:$0xff]
    %v662 = vld [vmem:[#allocation5 + $0x1b0] sm:$0xff]
    %v663 = vld [vmem:[#allocation5 + $0x1b8] sm:$0xff]
    %v664 = vld [vmem:[#allocation5 + $0x1c0] sm:$0xff]
    %v665 = vld [vmem:[#allocation5 + $0x1c8] sm:$0xff]
    %v666 = vld [vmem:[#allocation5 + $0x1d0] sm:$0xff]
    %v667 = vld [vmem:[#allocation5 + $0x1d8] sm:$0xff]
    %v668 = vld [vmem:[#allocation5 + $0x1e0] sm:$0xff]
    %v669 = vld [vmem:[#allocation5 + $0x1e8] sm:$0xff]
    %v670 = vld [vmem:[#allocation5 + $0x1f0] sm:$0xff]
    %v671 = vld [vmem:[#allocation5 + $0x1f8] sm:$0xff]
    %v672 = vld [vmem:[#allocation5 + $0x200] sm:$0xff]
    %v673 = vld [vmem:[#allocation5 + $0x208] sm:$0xff]
    %v674 = vld [vmem:[#allocation5 + $0x210] sm:$0xff]
    %v675 = vld [vmem:[#allocation5 + $0x218] sm:$0xff]
    %v676 = vld [vmem:[#allocation5 + $0x220] sm:$0xff]
    %v677 = vld [vmem:[#allocation5 + $0x228] sm:$0xff]
    %v678 = vld [vmem:[#allocation5 + $0x230] sm:$0xff]
    %v679 = vld [vmem:[#allocation5 + $0x238] sm:$0xff]
    %v680 = vld [vmem:[#allocation5 + $0x240] sm:$0xff]
    %v681 = vld [vmem:[#allocation5 + $0x248] sm:$0xff]
    %v682 = vld [vmem:[#allocation5 + $0x250] sm:$0xff]
    %v683 = vld [vmem:[#allocation5 + $0x258] sm:$0xff]
    %v684 = vld [vmem:[#allocation5 + $0x260] sm:$0xff]
    %v685 = vld [vmem:[#allocation5 + $0x268] sm:$0xff]
    %v686 = vld [vmem:[#allocation5 + $0x270] sm:$0xff]
    %v687 = vld [vmem:[#allocation5 + $0x278] sm:$0xff]
    %v688 = vld [vmem:[#allocation5 + $0x280] sm:$0xff]
    %v689 = vld [vmem:[#allocation5 + $0x288] sm:$0xff]
    %v690 = vld [vmem:[#allocation5 + $0x290] sm:$0xff]
    %v691 = vld [vmem:[#allocation5 + $0x298] sm:$0xff]
    %v692 = vld [vmem:[#allocation5 + $0x2a0] sm:$0xff]
    %v693 = vld [vmem:[#allocation5 + $0x2a8] sm:$0xff]
    %v694 = vld [vmem:[#allocation5 + $0x2b0] sm:$0xff]
    %v695 = vld [vmem:[#allocation5 + $0x2b8] sm:$0xff]
    %v696 = vld [vmem:[#allocation5 + $0x2c0] sm:$0xff]
    %v697 = vld [vmem:[#allocation5 + $0x2c8] sm:$0xff]
    %v698 = vld [vmem:[#allocation5 + $0x2d0] sm:$0xff]
    %v699 = vld [vmem:[#allocation5 + $0x2d8] sm:$0xff]
    %v700 = vld [vmem:[#allocation5 + $0x2e0] sm:$0xff]
    %v701 = vld [vmem:[#allocation5 + $0x2e8] sm:$0xff]
    %v702 = vld [vmem:[#allocation5 + $0x2f0] sm:$0xff]
    %v703 = vld [vmem:[#allocation5 + $0x2f8] sm:$0xff]
    %v704 = vld [vmem:[#allocation5 + $0x300] sm:$0xff]
    %v705 = vld [vmem:[#allocation5 + $0x308] sm:$0xff]
    %v706 = vld [vmem:[#allocation5 + $0x310] sm:$0xff]
    %v707 = vld [vmem:[#allocation5 + $0x318] sm:$0xff]
    %v708 = vld [vmem:[#allocation5 + $0x320] sm:$0xff]
    %v709 = vld [vmem:[#allocation5 + $0x328] sm:$0xff]
    %v710 = vld [vmem:[#allocation5 + $0x330] sm:$0xff]
    %v711 = vld [vmem:[#allocation5 + $0x338] sm:$0xff]
    %v712 = vld [vmem:[#allocation5 + $0x340] sm:$0xff]
    %v713 = vld [vmem:[#allocation5 + $0x348] sm:$0xff]
    %v714 = vld [vmem:[#allocation5 + $0x350] sm:$0xff]
    %v715 = vld [vmem:[#allocation5 + $0x358] sm:$0xff]
    %v716 = vld [vmem:[#allocation5 + $0x360] sm:$0xff]
    %v717 = vld [vmem:[#allocation5 + $0x368] sm:$0xff]
    %v718 = vld [vmem:[#allocation5 + $0x370] sm:$0xff]
    %v719 = vld [vmem:[#allocation5 + $0x378] sm:$0xff]
    %v720 = vld [vmem:[#allocation5 + $0x380] sm:$0xff]
    %v721 = vld [vmem:[#allocation5 + $0x388] sm:$0xff]
    %v722 = vld [vmem:[#allocation5 + $0x390] sm:$0xff]
    %v723 = vld [vmem:[#allocation5 + $0x398] sm:$0xff]
    %v724 = vld [vmem:[#allocation5 + $0x3a0] sm:$0xff]
    %v725 = vld [vmem:[#allocation5 + $0x3a8] sm:$0xff]
    %v726 = vld [vmem:[#allocation5 + $0x3b0] sm:$0xff]
    %v727 = vld [vmem:[#allocation5 + $0x3b8] sm:$0xff]
    %v728 = vld [vmem:[#allocation5 + $0x3c0] sm:$0xff]
    %v729 = vld [vmem:[#allocation5 + $0x3c8] sm:$0xff]
    %v730 = vld [vmem:[#allocation5 + $0x3d0] sm:$0xff]
    %v731 = vld [vmem:[#allocation5 + $0x3d8] sm:$0xff]
    %v732 = vld [vmem:[#allocation5 + $0x3e0] sm:$0xff]
    %v733 = vld [vmem:[#allocation5 + $0x3e8] sm:$0xff]
    %v734 = vld [vmem:[#allocation5 + $0x3f0] sm:$0xff]
    %v735 = vld [vmem:[#allocation5 + $0x3f8] sm:$0xff]
    %736 = vmatprep.subr.mxu0 %v609
    %737 = vmatpush1.msra.mxu0 %v608
    %738 = vmatprep.subr.mxu0 %v617
    %739 = vmatpush1.msra.mxu0 %v616
    %740 = vmatprep.subr.mxu0 %v625
    %741 = vmatpush1.msra.mxu0 %v624
    %742 = vmatprep.subr.mxu0 %v633
    %743 = vmatpush1.msra.mxu0 %v632
    %744 = vmatprep.subr.mxu0 %v641
    %745 = vmatpush1.msra.mxu0 %v640
    %746 = vmatprep.subr.mxu0 %v649
    %747 = vmatpush1.msra.mxu0 %v648
    %748 = vmatprep.subr.mxu0 %v657
    %749 = vmatpush1.msra.mxu0 %v656
    %750 = vmatprep.subr.mxu0 %v665
    %751 = vmatpush1.msra.mxu0 %v664
    %752 = vmatprep.subr.mxu0 %v673
    %753 = vmatpush1.msra.mxu0 %v672
    %754 = vmatprep.subr.mxu0 %v681
    %755 = vmatpush1.msra.mxu0 %v680
    %756 = vmatprep.subr.mxu0 %v689
    %757 = vmatpush1.msra.mxu0 %v688
    %758 = vmatprep.subr.mxu0 %v697
    %759 = vmatpush1.msra.mxu0 %v696
    %760 = vmatprep.subr.mxu0 %v705
    %761 = vmatpush1.msra.mxu0 %v704
    %762 = vmatprep.subr.mxu0 %v713
    %763 = vmatpush1.msra.mxu0 %v712
    %764 = vmatprep.subr.mxu0 %v721
    %765 = vmatpush1.msra.mxu0 %v720
    %766 = vmatprep.subr.mxu0 %v729
    %767 = vmatpush1.msra.mxu0 %v728
    %768 = vmatprep.subr.mxu0 0.0
    %769 = vmatpush1.msra.mxu0 0.0
    %770 = vmatprep.subr.mxu0 0.0
    %771 = vmatpush1.msra.mxu0 0.0
    %772 = vmatprep.subr.mxu0 0.0
    %773 = vmatpush1.msra.mxu0 0.0
    %774 = vmatprep.subr.mxu0 0.0
    %775 = vmatpush1.msra.mxu0 0.0
    %776 = vmatprep.subr.mxu0 0.0
    %777 = vmatpush1.msra.mxu0 0.0
    %778 = vmatprep.subr.mxu0 0.0
    %779 = vmatpush1.msra.mxu0 0.0
    %780 = vmatprep.subr.mxu0 0.0
    %781 = vmatpush1.msra.mxu0 0.0
    %782 = vmatprep.subr.mxu0 0.0
    %783 = vmatpush1.msra.mxu0 0.0
    %784 = vmatprep.subr.mxu0 0.0
    %785 = vmatpush1.msra.mxu0 0.0
    %786 = vmatprep.subr.mxu0 0.0
    %787 = vmatpush1.msra.mxu0 0.0
    %788 = vmatprep.subr.mxu0 0.0
    %789 = vmatpush1.msra.mxu0 0.0
    %790 = vmatprep.subr.mxu0 0.0
    %791 = vmatpush1.msra.mxu0 0.0
    %792 = vmatprep.subr.mxu0 0.0
    %793 = vmatpush1.msra.mxu0 0.0
    %794 = vmatprep.subr.mxu0 0.0
    %795 = vmatpush1.msra.mxu0 0.0
    %796 = vmatprep.subr.mxu0 0.0
    %797 = vmatpush1.msra.mxu0 0.0
    %798 = vmatprep.subr.mxu0 0.0
    %799 = vmatpush1.msra.mxu0 0.0
    %800 = vmatprep.mubr.f32.mxu0 0.0
    %801 = vmatmul.mubr.f32.gmra.mrb[0].mxu0 %v607
    %v802 = vpop.f32.mrb[0].mxu0
    %v803 = vadd.f32 1e-16, %v802
    %v804 = vpop.f32.mrb[0].mxu0
    %v805 = vadd.f32 1e-16, %v804
    %806 = vdwg.mxu0
    %807 = vmatprep.subr.mxu0 %v611
    %808 = vmatpush1.msra.mxu0 %v610
    %809 = vmatprep.subr.mxu0 %v619
    %810 = vmatpush1.msra.mxu0 %v618
    %811 = vmatprep.subr.mxu0 %v627
    %812 = vmatpush1.msra.mxu0 %v626
    %813 = vmatprep.subr.mxu0 %v635
    %814 = vmatpush1.msra.mxu0 %v634
    %815 = vmatprep.subr.mxu0 %v643
    %816 = vmatpush1.msra.mxu0 %v642
    %817 = vmatprep.subr.mxu0 %v651
    %818 = vmatpush1.msra.mxu0 %v650
    %819 = vmatprep.subr.mxu0 %v659
    %820 = vmatpush1.msra.mxu0 %v658
    %821 = vmatprep.subr.mxu0 %v667
    %822 = vmatpush1.msra.mxu0 %v666
    %823 = vmatprep.subr.mxu0 %v675
    %824 = vmatpush1.msra.mxu0 %v674
    %825 = vmatprep.subr.mxu0 %v683
    %826 = vmatpush1.msra.mxu0 %v682
    %827 = vmatprep.subr.mxu0 %v691
    %828 = vmatpush1.msra.mxu0 %v690
    %829 = vmatprep.subr.mxu0 %v699
    %830 = vmatpush1.msra.mxu0 %v698
    %831 = vmatprep.subr.mxu0 %v707
    %832 = vmatpush1.msra.mxu0 %v706
    %833 = vmatprep.subr.mxu0 %v715
    %834 = vmatpush1.msra.mxu0 %v714
    %835 = vmatprep.subr.mxu0 %v723
    %836 = vmatpush1.msra.mxu0 %v722
    %837 = vmatprep.subr.mxu0 %v731
    %838 = vmatpush1.msra.mxu0 %v730
    %839 = vmatprep.subr.mxu0 0.0
    %840 = vmatpush1.msra.mxu0 0.0
    %841 = vmatprep.subr.mxu0 0.0
    %842 = vmatpush1.msra.mxu0 0.0
    %843 = vmatprep.subr.mxu0 0.0
    %844 = vmatpush1.msra.mxu0 0.0
    %845 = vmatprep.subr.mxu0 0.0
    %846 = vmatpush1.msra.mxu0 0.0
    %847 = vmatprep.subr.mxu0 0.0
    %848 = vmatpush1.msra.mxu0 0.0
    %849 = vmatprep.subr.mxu0 0.0
    %850 = vmatpush1.msra.mxu0 0.0
    %851 = vmatprep.subr.mxu0 0.0
    %852 = vmatpush1.msra.mxu0 0.0
    %853 = vmatprep.subr.mxu0 0.0
    %854 = vmatpush1.msra.mxu0 0.0
    %855 = vmatprep.subr.mxu0 0.0
    %856 = vmatpush1.msra.mxu0 0.0
    %857 = vmatprep.subr.mxu0 0.0
    %858 = vmatpush1.msra.mxu0 0.0
    %859 = vmatprep.subr.mxu0 0.0
    %860 = vmatpush1.msra.mxu0 0.0
    %861 = vmatprep.subr.mxu0 0.0
    %862 = vmatpush1.msra.mxu0 0.0
    %863 = vmatprep.subr.mxu0 0.0
    %864 = vmatpush1.msra.mxu0 0.0
    %865 = vmatprep.subr.mxu0 0.0
    %866 = vmatpush1.msra.mxu0 0.0
    %867 = vmatprep.subr.mxu0 0.0
    %868 = vmatpush1.msra.mxu0 0.0
    %869 = vmatprep.subr.mxu0 0.0
    %870 = vmatpush1.msra.mxu0 0.0
    %871 = vmatprep.mubr.f32.mxu0 0.0
    %872 = vmatmul.mubr.f32.gmra.mrb[0].mxu0 %v607
    %v873 = vpop.f32.mrb[0].mxu0
    %v874 = vadd.f32 1e-16, %v873
    %v875 = vpop.f32.mrb[0].mxu0
    %v876 = vadd.f32 1e-16, %v875
    %877 = vdwg.mxu0
    %878 = vmatprep.subr.mxu0 %v613
    %879 = vmatpush1.msra.mxu0 %v612
    %880 = vmatprep.subr.mxu0 %v621
    %881 = vmatpush1.msra.mxu0 %v620
    %882 = vmatprep.subr.mxu0 %v629
    %883 = vmatpush1.msra.mxu0 %v628
    %884 = vmatprep.subr.mxu0 %v637
    %885 = vmatpush1.msra.mxu0 %v636
    %886 = vmatprep.subr.mxu0 %v645
    %887 = vmatpush1.msra.mxu0 %v644
    %888 = vmatprep.subr.mxu0 %v653
    %889 = vmatpush1.msra.mxu0 %v652
    %890 = vmatprep.subr.mxu0 %v661
    %891 = vmatpush1.msra.mxu0 %v660
    %892 = vmatprep.subr.mxu0 %v669
    %893 = vmatpush1.msra.mxu0 %v668
    %894 = vmatprep.subr.mxu0 %v677
    %895 = vmatpush1.msra.mxu0 %v676
    %896 = vmatprep.subr.mxu0 %v685
    %897 = vmatpush1.msra.mxu0 %v684
    %898 = vmatprep.subr.mxu0 %v693
    %899 = vmatpush1.msra.mxu0 %v692
    %900 = vmatprep.subr.mxu0 %v701
    %901 = vmatpush1.msra.mxu0 %v700
    %902 = vmatprep.subr.mxu0 %v709
    %903 = vmatpush1.msra.mxu0 %v708
    %904 = vmatprep.subr.mxu0 %v717
    %905 = vmatpush1.msra.mxu0 %v716
    %906 = vmatprep.subr.mxu0 %v725
    %907 = vmatpush1.msra.mxu0 %v724
    %908 = vmatprep.subr.mxu0 %v733
    %909 = vmatpush1.msra.mxu0 %v732
    %910 = vmatprep.subr.mxu0 0.0
    %911 = vmatpush1.msra.mxu0 0.0
    %912 = vmatprep.subr.mxu0 0.0
    %913 = vmatpush1.msra.mxu0 0.0
    %914 = vmatprep.subr.mxu0 0.0
    %915 = vmatpush1.msra.mxu0 0.0
    %916 = vmatprep.subr.mxu0 0.0
    %917 = vmatpush1.msra.mxu0 0.0
    %918 = vmatprep.subr.mxu0 0.0
    %919 = vmatpush1.msra.mxu0 0.0
    %920 = vmatprep.subr.mxu0 0.0
    %921 = vmatpush1.msra.mxu0 0.0
    %922 = vmatprep.subr.mxu0 0.0
    %923 = vmatpush1.msra.mxu0 0.0
    %924 = vmatprep.subr.mxu0 0.0
    %925 = vmatpush1.msra.mxu0 0.0
    %926 = vmatprep.subr.mxu0 0.0
    %927 = vmatpush1.msra.mxu0 0.0
    %928 = vmatprep.subr.mxu0 0.0
    %929 = vmatpush1.msra.mxu0 0.0
    %930 = vmatprep.subr.mxu0 0.0
    %931 = vmatpush1.msra.mxu0 0.0
    %932 = vmatprep.subr.mxu0 0.0
    %933 = vmatpush1.msra.mxu0 0.0
    %934 = vmatprep.subr.mxu0 0.0
    %935 = vmatpush1.msra.mxu0 0.0
    %936 = vmatprep.subr.mxu0 0.0
    %937 = vmatpush1.msra.mxu0 0.0
    %938 = vmatprep.subr.mxu0 0.0
    %939 = vmatpush1.msra.mxu0 0.0
    %940 = vmatprep.subr.mxu0 0.0
    %941 = vmatpush1.msra.mxu0 0.0
    %942 = vmatprep.mubr.f32.mxu0 0.0
    %943 = vmatmul.mubr.f32.gmra.mrb[0].mxu0 %v607
    %v944 = vpop.f32.mrb[0].mxu0
    %v945 = vadd.f32 1e-16, %v944
    %v946 = vpop.f32.mrb[0].mxu0
    %v947 = vadd.f32 1e-16, %v946
    %948 = vdwg.mxu0
    %949 = vmatprep.subr.mxu0 %v615
    %950 = vmatpush1.msra.mxu0 %v614
    %951 = vmatprep.subr.mxu0 %v623
    %952 = vmatpush1.msra.mxu0 %v622
    %953 = vmatprep.subr.mxu0 %v631
    %954 = vmatpush1.msra.mxu0 %v630
    %955 = vmatprep.subr.mxu0 %v639
    %956 = vmatpush1.msra.mxu0 %v638
    %957 = vmatprep.subr.mxu0 %v647
    %958 = vmatpush1.msra.mxu0 %v646
    %959 = vmatprep.subr.mxu0 %v655
    %960 = vmatpush1.msra.mxu0 %v654
    %961 = vmatprep.subr.mxu0 %v663
    %962 = vmatpush1.msra.mxu0 %v662
    %963 = vmatprep.subr.mxu0 %v671
    %964 = vmatpush1.msra.mxu0 %v670
    %965 = vmatprep.subr.mxu0 %v679
    %966 = vmatpush1.msra.mxu0 %v678
    %967 = vmatprep.subr.mxu0 %v687
    %968 = vmatpush1.msra.mxu0 %v686
    %969 = vmatprep.subr.mxu0 %v695
    %970 = vmatpush1.msra.mxu0 %v694
    %971 = vmatprep.subr.mxu0 %v703
    %972 = vmatpush1.msra.mxu0 %v702
    %973 = vmatprep.subr.mxu0 %v711
    %974 = vmatpush1.msra.mxu0 %v710
    %975 = vmatprep.subr.mxu0 %v719
    %976 = vmatpush1.msra.mxu0 %v718
    %977 = vmatprep.subr.mxu0 %v727
    %978 = vmatpush1.msra.mxu0 %v726
    %979 = vmatprep.subr.mxu0 %v735
    %980 = vmatpush1.msra.mxu0 %v734
    %981 = vmatprep.subr.mxu0 0.0
    %982 = vmatpush1.msra.mxu0 0.0
    %983 = vmatprep.subr.mxu0 0.0
    %984 = vmatpush1.msra.mxu0 0.0
    %985 = vmatprep.subr.mxu0 0.0
    %986 = vmatpush1.msra.mxu0 0.0
    %987 = vmatprep.subr.mxu0 0.0
    %988 = vmatpush1.msra.mxu0 0.0
    %989 = vmatprep.subr.mxu0 0.0
    %990 = vmatpush1.msra.mxu0 0.0
    %991 = vmatprep.subr.mxu0 0.0
    %992 = vmatpush1.msra.mxu0 0.0
    %993 = vmatprep.subr.mxu0 0.0
    %994 = vmatpush1.msra.mxu0 0.0
    %995 = vmatprep.subr.mxu0 0.0
    %996 = vmatpush1.msra.mxu0 0.0
    %997 = vmatprep.subr.mxu0 0.0
    %998 = vmatpush1.msra.mxu0 0.0
    %999 = vmatprep.subr.mxu0 0.0
    %1000 = vmatpush1.msra.mxu0 0.0
    %1001 = vmatprep.subr.mxu0 0.0
    %1002 = vmatpush1.msra.mxu0 0.0
    %1003 = vmatprep.subr.mxu0 0.0
    %1004 = vmatpush1.msra.mxu0 0.0
    %1005 = vmatprep.subr.mxu0 0.0
    %1006 = vmatpush1.msra.mxu0 0.0
    %1007 = vmatprep.subr.mxu0 0.0
    %1008 = vmatpush1.msra.mxu0 0.0
    %1009 = vmatprep.subr.mxu0 0.0
    %1010 = vmatpush1.msra.mxu0 0.0
    %1011 = vmatprep.subr.mxu0 0.0
    %1012 = vmatpush1.msra.mxu0 0.0
    %1013 = vmatprep.mubr.f32.mxu0 0.0
    %1014 = vmatmul.mubr.f32.gmra.mrb[0].mxu0 %v607
    %v1015 = vpop.f32.mrb[0].mxu0
    %v1016 = vadd.f32 1e-16, %v1015
    %v1017 = vpop.f32.mrb[0].mxu0
    %v1018 = vadd.f32 1e-16, %v1017
    %1019 = vdwg.mxu0
    %v1020 = vmul.f32 %v803, %v803
    %v1021 = vmul.f32 %v805, %v805
    %v1022 = vmul.f32 %v874, %v874
    %v1023 = vmul.f32 %v876, %v876
    %v1024 = vmul.f32 %v945, %v945
    %v1025 = vmul.f32 %v947, %v947
    %v1026 = vmul.f32 %v1016, %v1016
    %v1027 = vmul.f32 %v1018, %v1018
    %vm1028 = vcmask 1041408
    %v1029 = vsel %vm1028, %v1020, 0.0
    %v1030 = vsel %vm1028, %v1021, 0.0
    %v1031 = vadd.f32 %v1029, %v1030
    %v1032 = vsel %vm1028, %v1022, 0.0
    %v1033 = vadd.f32 %v1031, %v1032
    %v1034 = vsel %vm1028, %v1023, 0.0
    %v1035 = vadd.f32 %v1033, %v1034
    %v1036 = vsel %vm1028, %v1024, 0.0
    %v1037 = vadd.f32 %v1035, %v1036
    %v1038 = vsel %vm1028, %v1025, 0.0
    %v1039 = vadd.f32 %v1037, %v1038
    %v1040 = vsel %vm1028, %v1026, 0.0
    %v1041 = vadd.f32 %v1039, %v1040
    %v1042 = vsel %vm1028, %v1027, 0.0
    %v1043 = vadd.f32 %v1041, %v1042
    %1044 = vadd.xlane.f32.xlu0 %v1043
    %v1045 = vpop.xlane.xlu0 %1044
    %v1046 = vrsqrt.pop %v1045
    %v1047 = vmul.f32 %v1045, %v1046
    %vm1048 = vcmp.eq.f32.partialorder %v1045, inf
    %v1049 = vsel %vm1048, %v1045, %v1047
    %vm1050 = vcmp.eq.f32.partialorder %v1045, 0.0
    %v1051 = vand.u32 %v1045, 2147483648
    %v1052 = vsel %vm1050, %v1051, %v1049
    %v1053 = vsub.f32 %v1052, 1.0
    %v1054 = vmul.f32 %v1053, %v1053
    %vm1055 = vcmask 1024
    %v1056 = vsel %vm1055, %v1054, 0.0
    %1057 = vadd.xlane.f32.xlu0 %v1056
    %v1058 = vpop.xlane.xlu0 %1057
    %v1059 = vrot.slane %v1058, 4
    %v1060 = vadd.f32 %v1058, %v1059
    %v1061 = vrot.slane %v1060, 2
    %v1062 = vadd.f32 %v1060, %v1061
    %v1063 = vrot.slane %v1062, 1
    %v1064 = vadd.f32 %v1062, %v1063
    %s1065 = vtos %v1064
    %s1066 = scalar_lea.smem [#allocation7], 0
    %1067 = sst [smem:[%s1066]] %s1065
    // Predicated region
    $region38: #{gradient_penalty_loss.1} parent=1 // pred_check
      _
    $region39: #{gradient_penalty_loss.1} parent=1 // pred_check_branch
      %1069 = sbr.rel (0) target = $region41
    $region40: #{gradient_penalty_loss.1} parent=1 // pred_region
      %s1071 = ssub.s32 16, 16
      %1072 = vsyncadd [#allocation4], %s1071
      %1075 = dma.smem_to_hbm [#allocation7], 16, %s7, [#allocation4]
    $region41: #{gradient_penalty_loss.1} parent=1 // pred_fallthru
      _
    // Predicated region
    $region42: #{gradient_penalty_loss.1} parent=1 // pred_check
      _
    $region43: #{gradient_penalty_loss.1} parent=1 // pred_check_branch
      %1077 = sbr.rel (0) target = $region45
    $region44: #{gradient_penalty_loss.1} parent=1 // pred_region
      %1078 = dma.done [#allocation4], 16
    $region45: #{gradient_penalty_loss.1} parent=1 // pred_fallthru
      _
    %1079 = sfence
    %1080 = vsyncpa [#allocation3], 1
    %1081 = vsyncpa [#allocation6], 1
    %1082 = vsyncpa [#allocation4], 1

</llo_original>
